<compile_context>
chip_gen: v6e
topology: v6e:2x2x1
jax: 0.10.0
libtpu: 0.0.40
codegen_flags: <defaults>
</compile_context>

<pallas_src>
import functools

import jax
import jax.numpy as jnp
from jax.experimental import pallas as pl
from jax.experimental.pallas import tpu as pltpu

_SUBLANE = 8  # f32 sublane (second-to-last dim granularity)


def _round_up(n, m):
    return (n + m - 1) // m * m


def _policy_kernel(x_ref, w1_ref, b1_ref, w2_ref, b2_ref, o_ref, *, action_bound):
    # x_ref:  [TB, S]    w1_ref: [S, H]   b1_ref: [1, H]
    # w2_ref: [H, A]     b2_ref: [1, A]   o_ref:  [TB, A]
    mxu_dtype = w1_ref.dtype  # f32 (default) or bf16 (v6e/v7x fast path)

    # fc1 + ReLU  (MXU matmul in weight dtype, f32 accumulate, VPU max in f32)
    x = x_ref[...].astype(mxu_dtype)
    h = jnp.dot(x, w1_ref[...], preferred_element_type=jnp.float32) + b1_ref[...]
    h = jnp.maximum(h, 0.0)

    # fc2 + tanh (EUP) + action_bound scale, all fused in-kernel, f32 epilogue
    y = jnp.dot(h.astype(mxu_dtype), w2_ref[...],
                preferred_element_type=jnp.float32) + b2_ref[...]
    o_ref[...] = (jnp.tanh(y) * jnp.float32(action_bound)).astype(o_ref.dtype)


def prepare_params(w1, b1, w2, b2, *, mxu_dtype=jnp.float32):
    """One-time conversion of parameters to kernel-ready layout.

    Call this at parameter-init / parameter-update time, NOT per forward call.

    Args:
      w1: [state_dim, hidden_dim]   (transposed vs. torch's [out, in])
      b1: [hidden_dim]
      w2: [hidden_dim, action_dim]
      b2: [action_dim]
      mxu_dtype: jnp.float32 (exact parity) or jnp.bfloat16 (faster MXU on
        v6e/v7x, ~1e-3 numeric drift).
    Returns:
      (w1k, b1k, w2k, b2k) kernel-ready arrays.
    """
    return (jnp.asarray(w1, mxu_dtype),
            jnp.asarray(b1, jnp.float32).reshape(1, -1),
            jnp.asarray(w2, mxu_dtype),
            jnp.asarray(b2, jnp.float32).reshape(1, -1))


def policy_net_forward(x, params, action_bound, *, block_batch=1024):
    """Pallas forward pass of PolicyNet.

    Args:
      x: [batch, state_dim] float32
      params: output of prepare_params()
      action_bound: python float (compile-time constant)
      block_batch: max rows per grid step (amortizes ~0.35us/step pipeline
        overhead; per-step VMEM footprint is tiny at these feature dims).
    Returns:
      [batch, action_dim] float32
    """
    w1, b1, w2, b2 = params
    batch, state_dim = x.shape
    hidden_dim = w1.shape[1]
    action_dim = w2.shape[1]

    # Batch tile: sublane-aligned, never larger than needed; ceiling-division
    # grid so a batch just above a tile boundary costs one extra (ragged) step,
    # not a full doubling of work.
    tb = _round_up(min(block_batch, batch), _SUBLANE)
    grid = (pl.cdiv(batch, tb),)

    kernel = functools.partial(_policy_kernel, action_bound=float(action_bound))

    cost = pl.CostEstimate(
        flops=2 * batch * (state_dim * hidden_dim + hidden_dim * action_dim),
        transcendentals=batch * action_dim,
        bytes_accessed=(x.size * x.dtype.itemsize
                        + w1.size * w1.dtype.itemsize
                        + b1.size * 4
                        + w2.size * w2.dtype.itemsize
                        + b2.size * 4
                        + batch * action_dim * 4),
    )

    return pl.pallas_call(
        kernel,
        out_shape=jax.ShapeDtypeStruct((batch, action_dim), jnp.float32),
        grid=grid,
        in_specs=[
            # activations: stream one batch tile per grid step
            # (trailing block dim == full array dim -> no lane padding needed)
            pl.BlockSpec((tb, state_dim), lambda i: (i, 0)),
            # weights/biases: constant block index -> fetched once, VMEM-resident
            pl.BlockSpec((state_dim, hidden_dim), lambda i: (0, 0)),
            pl.BlockSpec((1, hidden_dim), lambda i: (0, 0)),
            pl.BlockSpec((hidden_dim, action_dim), lambda i: (0, 0)),
            pl.BlockSpec((1, action_dim), lambda i: (0, 0)),
        ],
        # last dim == action_dim (full dim): tiny masked store beats a padded
        # slab + separate slice op at these sizes.
        out_specs=pl.BlockSpec((tb, action_dim), lambda i: (i, 0)),
        compiler_params=pltpu.CompilerParams(
            dimension_semantics=("parallel",)),  # shards batch tiles across v7x TCs
        cost_estimate=cost,
    )(x, w1, b1, w2, b2)


def _torch_linear_init(key, fan_in, fan_out):
    """Deterministic init matching torch.nn.Linear's default:
    U(-1/sqrt(fan_in), 1/sqrt(fan_in)) for both weight and bias."""
    kw, kb = jax.random.split(key)
    bound = 1.0 / jnp.sqrt(jnp.float32(fan_in))
    # Weight stored as [in, out] for the kernel (torch stores [out, in]).
    w = jax.random.uniform(kw, (fan_in, fan_out), jnp.float32, -bound, bound)
    b = jax.random.uniform(kb, (fan_out,), jnp.float32, -bound, bound)
    return w, b


def _reference_forward(x, w1, b1, w2, b2, action_bound):
    h = jax.nn.relu(x @ w1 + b1)
    return jnp.tanh(h @ w2 + b2) * action_bound


if __name__ == "__main__":
    # HalfCheetah-ish dims: state_dim=17, hidden=32, action_dim=6.
    state_dim, hidden_dim, action_dim = 17, 32, 6
    action_bound = 1.0

    key = jax.random.PRNGKey(0)
    k_x, k_fc1, k_fc2, k_xl = jax.random.split(key, 4)

    w1, b1 = _torch_linear_init(k_fc1, state_dim, hidden_dim)
    w2, b2 = _torch_linear_init(k_fc2, hidden_dim, action_dim)

    ok = True

    # ---- exact-parity f32 path ---------------------------------------------
    params_f32 = prepare_params(w1, b1, w2, b2)  # one-time, outside the hot loop

    # 1) Small inference batch (single grid step, ragged sublane tile).
    x_small = jax.random.normal(k_x, (4, state_dim), jnp.float32)
    y = jax.block_until_ready(
        policy_net_forward(x_small, params_f32, action_bound))
    y_ref = _reference_forward(x_small, w1, b1, w2, b2, action_bound)
    ok &= y.shape == (4, action_dim)
    ok &= bool(jnp.allclose(y, y_ref, atol=1e-5, rtol=1e-5))

    # 2) Replay-buffer-sized batch: multi-step grid (cdiv -> 3 steps of 128
    #    with a ragged last tile), VMEM-resident weights across steps.
    x_big = jax.random.normal(k_xl, (300, state_dim), jnp.float32)
    y_big = jax.block_until_ready(
        policy_net_forward(x_big, params_f32, action_bound, block_batch=128))
    y_big_ref = _reference_forward(x_big, w1, b1, w2, b2, action_bound)
    ok &= y_big.shape == (300, action_dim)
    ok &= bool(jnp.allclose(y_big, y_big_ref, atol=1e-5, rtol=1e-5))

    # ---- bf16 MXU-operand path (v6e/v7x recommendation, looser tolerance) ---
    params_bf16 = prepare_params(w1, b1, w2, b2, mxu_dtype=jnp.bfloat16)
    y_bf16 = jax.block_until_ready(
        policy_net_forward(x_big, params_bf16, action_bound, block_batch=128))
    ok &= y_bf16.shape == (300, action_dim)
    ok &= bool(jnp.allclose(y_bf16, y_big_ref, atol=2e-2, rtol=2e-2))

    assert ok, "mismatch vs reference"
    print("KERNEL_OK")
</pallas_src>

<mosaic_0001>
module attributes {stable_mosaic.version = 11 : i64} {
  func.func @_policy_kernel(%arg0: i32, %arg1: memref<8x17xf32, #tpu.memory_space<vmem>>, %arg2: memref<17x32xf32, #tpu.memory_space<vmem>>, %arg3: memref<1x32xf32, #tpu.memory_space<vmem>>, %arg4: memref<32x6xf32, #tpu.memory_space<vmem>>, %arg5: memref<1x6xf32, #tpu.memory_space<vmem>>, %arg6: memref<8x6xf32, #tpu.memory_space<vmem>>) attributes {dimension_semantics = [#tpu.dimension_semantics<parallel>], iteration_bounds = array<i64: 1>, scalar_prefetch = 0 : i64, scratch_operands = 0 : i64, tpu.core_type = #tpu.core_type<tc>, window_params = [{transform_indices = @transform_0, window_bounds = array<i64: 8, 17>}, {pipeline_mode = #tpu.pipeline_mode<synchronous>, transform_indices = @transform_1, window_bounds = array<i64: 17, 32>}, {pipeline_mode = #tpu.pipeline_mode<synchronous>, transform_indices = @transform_2, window_bounds = array<i64: 1, 32>}, {pipeline_mode = #tpu.pipeline_mode<synchronous>, transform_indices = @transform_3, window_bounds = array<i64: 32, 6>}, {pipeline_mode = #tpu.pipeline_mode<synchronous>, transform_indices = @transform_4, window_bounds = array<i64: 1, 6>}, {transform_indices = @transform_5, window_bounds = array<i64: 8, 6>}]} {
    %c0 = arith.constant 0 : index
    %c0_0 = arith.constant 0 : index
    %0 = vector.load %arg1[%c0, %c0_0] : memref<8x17xf32, #tpu.memory_space<vmem>>, vector<8x17xf32>
    %c0_1 = arith.constant 0 : index
    %c0_2 = arith.constant 0 : index
    %1 = vector.load %arg2[%c0_1, %c0_2] : memref<17x32xf32, #tpu.memory_space<vmem>>, vector<17x32xf32>
    %cst = arith.constant dense<0.000000e+00> : vector<8x32xf32>
    %2 = tpu.matmul %0, %1, %cst {dimension_numbers = #tpu.dot_dimension_numbers<[1], [0], [0], [1], [0, 0, 1, 1], [], []>} : vector<8x17xf32>, vector<17x32xf32>, vector<8x32xf32> -> vector<8x32xf32>
    %c0_3 = arith.constant 0 : index
    %c0_4 = arith.constant 0 : index
    %3 = vector.load %arg3[%c0_3, %c0_4] : memref<1x32xf32, #tpu.memory_space<vmem>>, vector<1x32xf32>
    %4 = vector.broadcast %3 : vector<1x32xf32> to vector<8x32xf32>
    %5 = arith.addf %2, %4 : vector<8x32xf32>
    %cst_5 = arith.constant 0.000000e+00 : f32
    %6 = vector.broadcast %cst_5 : f32 to vector<8x32xf32>
    %7 = arith.maximumf %5, %6 : vector<8x32xf32>
    %c0_6 = arith.constant 0 : index
    %c0_7 = arith.constant 0 : index
    %8 = vector.load %arg4[%c0_6, %c0_7] : memref<32x6xf32, #tpu.memory_space<vmem>>, vector<32x6xf32>
    %cst_8 = arith.constant dense<0.000000e+00> : vector<8x6xf32>
    %9 = tpu.matmul %7, %8, %cst_8 {dimension_numbers = #tpu.dot_dimension_numbers<[1], [0], [0], [1], [0, 0, 1, 1], [], []>} : vector<8x32xf32>, vector<32x6xf32>, vector<8x6xf32> -> vector<8x6xf32>
    %c0_9 = arith.constant 0 : index
    %c0_10 = arith.constant 0 : index
    %10 = vector.load %arg5[%c0_9, %c0_10] : memref<1x6xf32, #tpu.memory_space<vmem>>, vector<1x6xf32>
    %11 = vector.broadcast %10 : vector<1x6xf32> to vector<8x6xf32>
    %12 = arith.addf %9, %11 : vector<8x6xf32>
    %13 = math.tanh %12 : vector<8x6xf32>
    %cst_11 = arith.constant 1.000000e+00 : f32
    %14 = vector.broadcast %cst_11 : f32 to vector<8x6xf32>
    %15 = arith.mulf %13, %14 : vector<8x6xf32>
    %c0_12 = arith.constant 0 : index
    %c0_13 = arith.constant 0 : index
    %16 = vector.load %arg6[%c0_12, %c0_13] : memref<8x6xf32, #tpu.memory_space<vmem>>, vector<8x6xf32>
    tpu.vector_store %arg6[%c0_12, %c0_13], %15 {strides = array<i32>} : memref<8x6xf32, #tpu.memory_space<vmem>>, vector<8x6xf32>,
    return
  }
  func.func @transform_0(%arg0: i32) -> (i32, i32) {
    %c0_i32 = arith.constant 0 : i32
    %c0_i32_0 = arith.constant 0 : i32
    return %arg0, %c0_i32 : i32, i32
  }
  func.func @transform_1(%arg0: i32) -> (i32, i32) {
    %c0_i32 = arith.constant 0 : i32
    %c0_i32_0 = arith.constant 0 : i32
    %c0_i32_1 = arith.constant 0 : i32
    return %c0_i32, %c0_i32_0 : i32, i32
  }
  func.func @transform_2(%arg0: i32) -> (i32, i32) {
    %c0_i32 = arith.constant 0 : i32
    %c0_i32_0 = arith.constant 0 : i32
    %c0_i32_1 = arith.constant 0 : i32
    return %c0_i32, %c0_i32_0 : i32, i32
  }
  func.func @transform_3(%arg0: i32) -> (i32, i32) {
    %c0_i32 = arith.constant 0 : i32
    %c0_i32_0 = arith.constant 0 : i32
    %c0_i32_1 = arith.constant 0 : i32
    return %c0_i32, %c0_i32_0 : i32, i32
  }
  func.func @transform_4(%arg0: i32) -> (i32, i32) {
    %c0_i32 = arith.constant 0 : i32
    %c0_i32_0 = arith.constant 0 : i32
    %c0_i32_1 = arith.constant 0 : i32
    return %c0_i32, %c0_i32_0 : i32, i32
  }
  func.func @transform_5(%arg0: i32) -> (i32, i32) {
    %c0_i32 = arith.constant 0 : i32
    %c0_i32_0 = arith.constant 0 : i32
    return %arg0, %c0_i32 : i32, i32
  }
}

</mosaic_0001>

<llo_original>
// kernel: tpu_custom_call.1
$region0: #{tpu_custom_call.1}
  #allocation0 [shape = 'u32[]', space=smem, size = 0x4, offset = 0x4, fixed_abs, tag = 'smem constant byte address 0x4 - core index']
  #allocation1 [shape = 'u32[144,128]{1,0:T(1,128)}', space=vmem, size = 0x12000, scoped, tag = 'internal scratch']
  %s0 = inlined_call_operand.vmem [shape: f32[4,17], index: 0, kind: input, shape index: {}]
  %s1 = inlined_call_operand.vmem [shape: f32[17,32], index: 1, kind: input, shape index: {}]
  %s2 = inlined_call_operand.vmem [shape: f32[1,32], index: 2, kind: input, shape index: {}]
  %s3 = inlined_call_operand.vmem [shape: f32[32,6], index: 3, kind: input, shape index: {}]
  %s4 = inlined_call_operand.vmem [shape: f32[1,6], index: 4, kind: input, shape index: {}]
  %s5 = inlined_call_operand.hbm [shape: f32[4,6], index: 5, kind: output, shape index: {}]
  %s6 = sld [smem:[#allocation0]]
  $region30: #{tpu_custom_call.1} parent=0
    _
  %s8 = ssub.s32 1, %s6
  %s9 = scalar_select 0, %s8, %s6
  $region1: #{tpu_custom_call.1} parent=0
    #allocation2 [shape = 'u8[4096]{0}', space=vmem, size = 0x1000, scoped, tag = 'output window, operand 0, single buffered']
    #allocation3 [shape = 's32[1]{0}', space=sflag, size = 0x4, scoped, tag = 'scoped memory for tpu_custom_call.1']
    %10 = vsyncpa [#allocation3], 0
    // Predicated region
    $region2: #{tpu_custom_call.1} parent=1 // pred_check
      _
    $region3: #{tpu_custom_call.1} parent=1 // pred_check_branch
      %12 = sbr.rel (0) target = $region5
    $region4: #{tpu_custom_call.1} parent=1 // pred_region
      _
    $region5: #{tpu_custom_call.1} parent=1 // pred_fallthru
      _
    // Predicated region
    $region6: #{tpu_custom_call.1} parent=1 // pred_check
      _
    $region7: #{tpu_custom_call.1} parent=1 // pred_check_branch
      %14 = sbr.rel (0) target = $region9
    $region8: #{tpu_custom_call.1} parent=1 // pred_region
      _
    $region9: #{tpu_custom_call.1} parent=1 // pred_fallthru
      _
    // Predicated region
    $region10: #{tpu_custom_call.1} parent=1 // pred_check
      _
    $region11: #{tpu_custom_call.1} parent=1 // pred_check_branch
      %16 = sbr.rel (0) target = $region13
    $region12: #{tpu_custom_call.1} parent=1 // pred_region
      _
    $region13: #{tpu_custom_call.1} parent=1 // pred_fallthru
      _
    // Predicated region
    $region14: #{tpu_custom_call.1} parent=1 // pred_check
      _
    $region15: #{tpu_custom_call.1} parent=1 // pred_check_branch
      %18 = sbr.rel (0) target = $region17
    $region16: #{tpu_custom_call.1} parent=1 // pred_region
      _
    $region17: #{tpu_custom_call.1} parent=1 // pred_fallthru
      _
    // Predicated region
    $region18: #{tpu_custom_call.1} parent=1 // pred_check
      _
    $region19: #{tpu_custom_call.1} parent=1 // pred_check_branch
      %20 = sbr.rel (0) target = $region21
    $region20: #{tpu_custom_call.1} parent=1 // pred_region
      _
    $region21: #{tpu_custom_call.1} parent=1 // pred_fallthru
      _
    %v21 = vld [vmem:[%s0] sm:$0xff]
    %v22 = vld [vmem:[%s1] sm:$0xff]
    %v23 = vld [vmem:[%s1 + $0x8] sm:$0xff]
    %v24 = vld [vmem:[%s1 + $0x10] sm:$0x1]
    %v25 = vld [vmem:[%s2] sm:$0x1]
    %v27 = vlaneseq
    %v28 = vshrl.u32 %v27, 7
    %v29 = vsub.s32 0, %v28
    %v30 = vrot.slane %v25, %v29
    %vm32 = vcmask 138240
    %v34 = vsel %vm32, %v21, 0
    %vm36 = vcmask 1040384
    %v38 = vsel %vm36, %v24, 0
    %40 = vmatprep.subr.mxu0 0.0
    %41 = vmatpush1.msra.mxu0 0.0
    %42 = vmatprep.subr.mxu0 0.0
    %43 = vmatpush1.msra.mxu0 0.0
    %44 = vmatprep.subr.mxu0 0.0
    %45 = vmatpush1.msra.mxu0 0.0
    %46 = vmatprep.subr.mxu0 0.0
    %47 = vmatpush1.msra.mxu0 0.0
    %48 = vmatprep.subr.mxu0 0.0
    %49 = vmatpush1.msra.mxu0 0.0
    %50 = vmatprep.subr.mxu0 0.0
    %51 = vmatpush1.msra.mxu0 0.0
    %52 = vmatprep.subr.mxu0 0.0
    %53 = vmatpush1.msra.mxu0 0.0
    %54 = vmatprep.subr.mxu0 0.0
    %55 = vmatpush1.msra.mxu0 0.0
    %56 = vmatprep.subr.mxu0 0.0
    %57 = vmatpush1.msra.mxu0 0.0
    %58 = vmatprep.subr.mxu0 0.0
    %59 = vmatpush1.msra.mxu0 0.0
    %60 = vmatprep.subr.mxu0 0.0
    %61 = vmatpush1.msra.mxu0 0.0
    %62 = vmatprep.subr.mxu0 0.0
    %63 = vmatpush1.msra.mxu0 0.0
    %64 = vmatprep.subr.mxu0 0.0
    %65 = vmatpush1.msra.mxu0 0.0
    %66 = vmatprep.subr.mxu0 0.0
    %67 = vmatpush1.msra.mxu0 %v38
    %68 = vmatprep.subr.mxu0 0.0
    %69 = vmatpush1.msra.mxu0 %v23
    %70 = vmatprep.subr.mxu0 0.0
    %71 = vmatpush1.msra.mxu0 %v22
    %72 = vmatprep.subr.mxu0 0.0
    %73 = vmatpush2.msra.mxu0 0.0
    %74 = vmatprep.subr.mxu0 0.0
    %75 = vmatpush2.msra.mxu0 0.0
    %76 = vmatprep.subr.mxu0 0.0
    %77 = vmatpush2.msra.mxu0 0.0
    %78 = vmatprep.subr.mxu0 0.0
    %79 = vmatpush2.msra.mxu0 0.0
    %80 = vmatprep.subr.mxu0 0.0
    %81 = vmatpush2.msra.mxu0 0.0
    %82 = vmatprep.subr.mxu0 0.0
    %83 = vmatpush2.msra.mxu0 0.0
    %84 = vmatprep.subr.mxu0 0.0
    %85 = vmatpush2.msra.mxu0 0.0
    %86 = vmatprep.subr.mxu0 0.0
    %87 = vmatpush2.msra.mxu0 0.0
    %88 = vmatprep.subr.mxu0 0.0
    %89 = vmatpush2.msra.mxu0 0.0
    %90 = vmatprep.subr.mxu0 0.0
    %91 = vmatpush2.msra.mxu0 0.0
    %92 = vmatprep.subr.mxu0 0.0
    %93 = vmatpush2.msra.mxu0 0.0
    %94 = vmatprep.subr.mxu0 0.0
    %95 = vmatpush2.msra.mxu0 0.0
    %96 = vmatprep.subr.mxu0 0.0
    %97 = vmatpush2.msra.mxu0 0.0
    %98 = vmatprep.subr.mxu0 0.0
    %99 = vmatpush2.msra.mxu0 0.0
    %100 = vmatprep.subr.mxu0 0.0
    %101 = vmatpush2.msra.mxu0 0.0
    %102 = vmatprep.subr.mxu0 0.0
    %103 = vmatpush2.msra.mxu0 0.0
    %104 = vmatprep.mubr.f32.mxu0 0.0
    %105 = vmatmul.mubr.f32.gmra.mxu0 %v34
    %v106 = vpop.f32.mrf.mxu0
    %v107 = vadd.f32 %v30, %v106
    %v108 = vpop.f32.mrf.mxu0
    %109 = vdwg.mxu0
    %v110 = vmax.f32 %v107, 0.0
    %v111 = vld [vmem:[%s3] sm:$0xff]
    %v112 = vld [vmem:[%s3 + $0x8] sm:$0xff]
    %v113 = vld [vmem:[%s3 + $0x10] sm:$0xff]
    %v114 = vld [vmem:[%s3 + $0x18] sm:$0xff]
    %v115 = vld [vmem:[%s4] sm:$0x1]
    %v117 = vlaneseq
    %v118 = vshrl.u32 %v117, 7
    %v119 = vsub.s32 0, %v118
    %v120 = vrot.slane %v115, %v119
    %vm122 = vcmask 261120
    %v124 = vsel %vm122, %v110, 0
    %126 = vmatprep.subr.mxu0 0.0
    %127 = vmatpush1.msra.mxu0 0.0
    %128 = vmatprep.subr.mxu0 0.0
    %129 = vmatpush1.msra.mxu0 0.0
    %130 = vmatprep.subr.mxu0 0.0
    %131 = vmatpush1.msra.mxu0 0.0
    %132 = vmatprep.subr.mxu0 0.0
    %133 = vmatpush1.msra.mxu0 0.0
    %134 = vmatprep.subr.mxu0 0.0
    %135 = vmatpush1.msra.mxu0 0.0
    %136 = vmatprep.subr.mxu0 0.0
    %137 = vmatpush1.msra.mxu0 0.0
    %138 = vmatprep.subr.mxu0 0.0
    %139 = vmatpush1.msra.mxu0 0.0
    %140 = vmatprep.subr.mxu0 0.0
    %141 = vmatpush1.msra.mxu0 0.0
    %142 = vmatprep.subr.mxu0 0.0
    %143 = vmatpush1.msra.mxu0 0.0
    %144 = vmatprep.subr.mxu0 0.0
    %145 = vmatpush1.msra.mxu0 0.0
    %146 = vmatprep.subr.mxu0 0.0
    %147 = vmatpush1.msra.mxu0 0.0
    %148 = vmatprep.subr.mxu0 0.0
    %149 = vmatpush1.msra.mxu0 0.0
    %150 = vmatprep.subr.mxu0 0.0
    %151 = vmatpush1.msra.mxu0 %v114
    %152 = vmatprep.subr.mxu0 0.0
    %153 = vmatpush1.msra.mxu0 %v113
    %154 = vmatprep.subr.mxu0 0.0
    %155 = vmatpush1.msra.mxu0 %v112
    %156 = vmatprep.subr.mxu0 0.0
    %157 = vmatpush1.msra.mxu0 %v111
    %158 = vmatprep.subr.mxu0 0.0
    %159 = vmatpush2.msra.mxu0 0.0
    %160 = vmatprep.subr.mxu0 0.0
    %161 = vmatpush2.msra.mxu0 0.0
    %162 = vmatprep.subr.mxu0 0.0
    %163 = vmatpush2.msra.mxu0 0.0
    %164 = vmatprep.subr.mxu0 0.0
    %165 = vmatpush2.msra.mxu0 0.0
    %166 = vmatprep.subr.mxu0 0.0
    %167 = vmatpush2.msra.mxu0 0.0
    %168 = vmatprep.subr.mxu0 0.0
    %169 = vmatpush2.msra.mxu0 0.0
    %170 = vmatprep.subr.mxu0 0.0
    %171 = vmatpush2.msra.mxu0 0.0
    %172 = vmatprep.subr.mxu0 0.0
    %173 = vmatpush2.msra.mxu0 0.0
    %174 = vmatprep.subr.mxu0 0.0
    %175 = vmatpush2.msra.mxu0 0.0
    %176 = vmatprep.subr.mxu0 0.0
    %177 = vmatpush2.msra.mxu0 0.0
    %178 = vmatprep.subr.mxu0 0.0
    %179 = vmatpush2.msra.mxu0 0.0
    %180 = vmatprep.subr.mxu0 0.0
    %181 = vmatpush2.msra.mxu0 0.0
    %182 = vmatprep.subr.mxu0 0.0
    %183 = vmatpush2.msra.mxu0 0.0
    %184 = vmatprep.subr.mxu0 0.0
    %185 = vmatpush2.msra.mxu0 0.0
    %186 = vmatprep.subr.mxu0 0.0
    %187 = vmatpush2.msra.mxu0 0.0
    %188 = vmatprep.subr.mxu0 0.0
    %189 = vmatpush2.msra.mxu0 0.0
    %190 = vmatprep.mubr.f32.mxu0 0.0
    %191 = vmatmul.mubr.f32.gmra.mxu0 %v124
    %v192 = vpop.f32.mrf.mxu0
    %v193 = vadd.f32 %v120, %v192
    %v194 = vpop.f32.mrf.mxu0
    %195 = vdwg.mxu0
    %v196 = vtanh.pop %v193
    %vm197 = vcmask 48128
    %198 = vst.msk [vmem:[#allocation2] sm:$0xff] %vm197, %v196
    // Predicated region
    $region22: #{tpu_custom_call.1} parent=1 // pred_check
      _
    $region23: #{tpu_custom_call.1} parent=1 // pred_check_branch
      %200 = sbr.rel (0) target = $region25
    $region24: #{tpu_custom_call.1} parent=1 // pred_region
      %s202 = ssub.s32 128, 64
      %203 = vsyncadd [#allocation3], %s202
      %s204 = sshll.u32 [#allocation2], 4
      %s205 = int_to_ptr.vmem [resolvable:$true] %s204
      %210 = dma.vmem_to_hbm [thread:$0]  %s205, 64, %s5, [#allocation3], 64, 64, 4
    $region25: #{tpu_custom_call.1} parent=1 // pred_fallthru
      _
    // Predicated region
    $region26: #{tpu_custom_call.1} parent=1 // pred_check
      _
    $region27: #{tpu_custom_call.1} parent=1 // pred_check_branch
      %212 = sbr.rel (0) target = $region29
    $region28: #{tpu_custom_call.1} parent=1 // pred_region
      %213 = dma.done [#allocation3], 128
    $region29: #{tpu_custom_call.1} parent=1 // pred_fallthru
      _
    %214 = vsyncpa [#allocation3], 1

</llo_original>
